<compile_context>
chip_gen: v7x
topology: tpu7x:2x2x1
jax: 0.10.0
libtpu: 0.0.40
codegen_flags: <defaults>
</compile_context>

<pallas_src>
import math

import jax
import jax.numpy as jnp
from jax.experimental import pallas as pl
from jax.experimental.pallas import tpu as pltpu

_LANE = 128           # lane width
_SUBLANE = 8          # sublane granularity (f32)
_MAX_TILE_ROWS = 512  # 512 rows x 128 lanes = 65536 points per grid step


def _camera_project_kernel(m_ref, pts_ref, out_ref):
    # m_ref:   (3, 4) folded affine (camera_to_image @ world_to_camera[:3,:]) in SMEM
    # pts_ref: (3, TR, 128) coordinate-major world points in VMEM
    # out_ref: (2, TR, 128) image coordinates in VMEM
    x = pts_ref[0]
    y = pts_ref[1]
    z = pts_ref[2]

    u = m_ref[0, 0] * x + m_ref[0, 1] * y + m_ref[0, 2] * z + m_ref[0, 3]
    v = m_ref[1, 0] * x + m_ref[1, 1] * y + m_ref[1, 2] * z + m_ref[1, 3]
    w = m_ref[2, 0] * x + m_ref[2, 1] * y + m_ref[2, 2] * z + m_ref[2, 3]

    # from_homogenous: one exact reciprocal + two multiplies (holds 1e-4 tolerance)
    inv_w = pl.reciprocal(w, approx=False)
    out_ref[0] = u * inv_w
    out_ref[1] = v * inv_w


def _round_up(a: int, b: int) -> int:
    return ((a + b - 1) // b) * b


@jax.jit
def _camera_project(points_world, world_to_camera, camera_to_image):
    # Fold extrinsics + intrinsics into one 3x4 affine (tiny, fused under jit).
    m = (camera_to_image @ world_to_camera[:3, :]).astype(jnp.float32)

    orig_shape = points_world.shape
    pts = points_world.reshape(-1, 3).astype(jnp.float32)
    n = pts.shape[0]

    rows = max(_SUBLANE, _round_up(-(-n // _LANE), _SUBLANE))
    tr = min(_MAX_TILE_ROWS, rows)          # tile rows (multiple of 8)
    rows = _round_up(rows, tr)
    n_pad = rows * _LANE
    grid = rows // tr

    # Pad with (1,1,1): keeps the homogeneous divisor nonzero for the identity
    # extrinsics buffer; padded outputs are sliced away below anyway.
    pts = jnp.pad(pts, ((0, n_pad - n), (0, 0)), constant_values=1.0)
    pts_cm = pts.T.reshape(3, rows, _LANE)  # coordinate-major, lane-dense

    out = pl.pallas_call(
        _camera_project_kernel,
        out_shape=jax.ShapeDtypeStruct((2, rows, _LANE), jnp.float32),
        grid=(grid,),
        in_specs=[
            pl.BlockSpec(memory_space=pltpu.MemorySpace.SMEM),   # folded 3x4 matrix
            pl.BlockSpec((3, tr, _LANE), lambda i: (0, i, 0)),   # points (coord-major)
        ],
        out_specs=pl.BlockSpec((2, tr, _LANE), lambda i: (0, i, 0)),
        compiler_params=pltpu.CompilerParams(dimension_semantics=("parallel",)),
    )(m, pts_cm)

    res = out.reshape(2, n_pad).T[:n]       # (n, 2)
    return res.reshape(*orig_shape[:-1], 2)


class Camera:
    """Deterministic re-implementation of the PyTorch Camera module buffers."""

    def __init__(self, image_height: int, image_width: int):
        self.image_height = image_height
        self.image_width = image_width
        fov_x = math.pi / 2.0
        self.focal = 0.5 * image_width / math.tan(0.5 * fov_x)

        self.world_to_camera = jnp.eye(4, dtype=jnp.float32)
        # NOTE: only a valid "inverse" because world_to_camera is the identity buffer.
        self.camera_to_world = self.world_to_camera
        self.camera_to_image = jnp.array(
            [[self.focal, 0.0, image_width / 2.0],
             [0.0, self.focal, image_height / 2.0],
             [0.0, 0.0, 1.0]],
            dtype=jnp.float32,
        )
        self.image_to_camera = jnp.linalg.inv(self.camera_to_image)
        # TODO(synk): unproject() (meshgrid-based depth unprojection) not ported; only forward().

    def forward(self, points_world: jax.Array) -> jax.Array:
        return _camera_project(points_world, self.world_to_camera, self.camera_to_image)


def _reference_forward(cam: Camera, points_world: jax.Array) -> jax.Array:
    """Plain-JAX reference mirroring the PyTorch forward exactly."""
    pts = points_world.astype(jnp.float32)
    ones = jnp.ones(pts.shape[:-1] + (1,), dtype=jnp.float32)
    pts_h = jnp.concatenate([pts, ones], axis=-1)                 # to_homogenous
    pts_cam_h = pts_h @ cam.world_to_camera.T
    pts_img_h = pts_cam_h[..., :3] @ cam.camera_to_image.T
    return pts_img_h[..., :2] / pts_img_h[..., 2:3]               # from_homogenous


if __name__ == "__main__":
    key = jax.random.PRNGKey(0)
    k_xy, k_z = jax.random.split(key)

    # small batch of 3D world points: batch=2, 8 points each
    xy = jax.random.normal(k_xy, (2, 8, 2), dtype=jnp.float32)
    z = jax.random.uniform(k_z, (2, 8, 1), minval=0.5, maxval=2.0, dtype=jnp.float32)
    points_world = jnp.concatenate([xy, z], axis=-1)  # (2, 8, 3)

    cam = Camera(image_height=16, image_width=16)

    out = cam.forward(points_world)
    out = jax.block_until_ready(out)

    ref = _reference_forward(cam, points_world)
    assert out.shape == (2, 8, 2), out.shape
    assert jnp.allclose(out, ref, atol=1e-4, rtol=1e-4), (out, ref)

    print("KERNEL_OK")
</pallas_src>

<mosaic_0001>
module attributes {stable_mosaic.version = 11 : i64} {
  func.func @_camera_project_kernel(%arg0: i32, %arg1: memref<3x4xf32, #tpu.memory_space<smem>>, %arg2: memref<3x8x128xf32, #tpu.memory_space<vmem>>, %arg3: memref<2x8x128xf32, #tpu.memory_space<vmem>>) attributes {dimension_semantics = [#tpu.dimension_semantics<parallel>], iteration_bounds = array<i64: 1>, scalar_prefetch = 0 : i64, scratch_operands = 0 : i64, tpu.core_type = #tpu.core_type<tc>, window_params = [{transform_indices = @transform_0, window_bounds = array<i64: 3, 4>}, {transform_indices = @transform_1, window_bounds = array<i64: 3, 8, 128>}, {transform_indices = @transform_2, window_bounds = array<i64: 2, 8, 128>}]} {
    %c0 = arith.constant 0 : index
    %c0_0 = arith.constant 0 : index
    %c0_1 = arith.constant 0 : index
    %0 = vector.load %arg2[%c0, %c0_0, %c0_1] : memref<3x8x128xf32, #tpu.memory_space<vmem>>, vector<1x8x128xf32>
    %1 = vector.shape_cast %0 : vector<1x8x128xf32> to vector<8x128xf32>
    %c1 = arith.constant 1 : index
    %c0_2 = arith.constant 0 : index
    %c0_3 = arith.constant 0 : index
    %2 = vector.load %arg2[%c1, %c0_2, %c0_3] : memref<3x8x128xf32, #tpu.memory_space<vmem>>, vector<1x8x128xf32>
    %3 = vector.shape_cast %2 : vector<1x8x128xf32> to vector<8x128xf32>
    %c2 = arith.constant 2 : index
    %c0_4 = arith.constant 0 : index
    %c0_5 = arith.constant 0 : index
    %4 = vector.load %arg2[%c2, %c0_4, %c0_5] : memref<3x8x128xf32, #tpu.memory_space<vmem>>, vector<1x8x128xf32>
    %5 = vector.shape_cast %4 : vector<1x8x128xf32> to vector<8x128xf32>
    %c0_6 = arith.constant 0 : index
    %c0_7 = arith.constant 0 : index
    %6 = memref.load %arg1[%c0_6, %c0_7] : memref<3x4xf32, #tpu.memory_space<smem>>
    %7 = vector.broadcast %6 : f32 to vector<8x128xf32>
    %8 = arith.mulf %7, %1 : vector<8x128xf32>
    %c0_8 = arith.constant 0 : index
    %c1_9 = arith.constant 1 : index
    %9 = memref.load %arg1[%c0_8, %c1_9] : memref<3x4xf32, #tpu.memory_space<smem>>
    %10 = vector.broadcast %9 : f32 to vector<8x128xf32>
    %11 = arith.mulf %10, %3 : vector<8x128xf32>
    %12 = arith.addf %8, %11 : vector<8x128xf32>
    %c0_10 = arith.constant 0 : index
    %c2_11 = arith.constant 2 : index
    %13 = memref.load %arg1[%c0_10, %c2_11] : memref<3x4xf32, #tpu.memory_space<smem>>
    %14 = vector.broadcast %13 : f32 to vector<8x128xf32>
    %15 = arith.mulf %14, %5 : vector<8x128xf32>
    %16 = arith.addf %12, %15 : vector<8x128xf32>
    %c0_12 = arith.constant 0 : index
    %c3 = arith.constant 3 : index
    %17 = memref.load %arg1[%c0_12, %c3] : memref<3x4xf32, #tpu.memory_space<smem>>
    %18 = vector.broadcast %17 : f32 to vector<8x128xf32>
    %19 = arith.addf %16, %18 : vector<8x128xf32>
    %c1_13 = arith.constant 1 : index
    %c0_14 = arith.constant 0 : index
    %20 = memref.load %arg1[%c1_13, %c0_14] : memref<3x4xf32, #tpu.memory_space<smem>>
    %21 = vector.broadcast %20 : f32 to vector<8x128xf32>
    %22 = arith.mulf %21, %1 : vector<8x128xf32>
    %c1_15 = arith.constant 1 : index
    %c1_16 = arith.constant 1 : index
    %23 = memref.load %arg1[%c1_15, %c1_16] : memref<3x4xf32, #tpu.memory_space<smem>>
    %24 = vector.broadcast %23 : f32 to vector<8x128xf32>
    %25 = arith.mulf %24, %3 : vector<8x128xf32>
    %26 = arith.addf %22, %25 : vector<8x128xf32>
    %c1_17 = arith.constant 1 : index
    %c2_18 = arith.constant 2 : index
    %27 = memref.load %arg1[%c1_17, %c2_18] : memref<3x4xf32, #tpu.memory_space<smem>>
    %28 = vector.broadcast %27 : f32 to vector<8x128xf32>
    %29 = arith.mulf %28, %5 : vector<8x128xf32>
    %30 = arith.addf %26, %29 : vector<8x128xf32>
    %c1_19 = arith.constant 1 : index
    %c3_20 = arith.constant 3 : index
    %31 = memref.load %arg1[%c1_19, %c3_20] : memref<3x4xf32, #tpu.memory_space<smem>>
    %32 = vector.broadcast %31 : f32 to vector<8x128xf32>
    %33 = arith.addf %30, %32 : vector<8x128xf32>
    %c2_21 = arith.constant 2 : index
    %c0_22 = arith.constant 0 : index
    %34 = memref.load %arg1[%c2_21, %c0_22] : memref<3x4xf32, #tpu.memory_space<smem>>
    %35 = vector.broadcast %34 : f32 to vector<8x128xf32>
    %36 = arith.mulf %35, %1 : vector<8x128xf32>
    %c2_23 = arith.constant 2 : index
    %c1_24 = arith.constant 1 : index
    %37 = memref.load %arg1[%c2_23, %c1_24] : memref<3x4xf32, #tpu.memory_space<smem>>
    %38 = vector.broadcast %37 : f32 to vector<8x128xf32>
    %39 = arith.mulf %38, %3 : vector<8x128xf32>
    %40 = arith.addf %36, %39 : vector<8x128xf32>
    %c2_25 = arith.constant 2 : index
    %c2_26 = arith.constant 2 : index
    %41 = memref.load %arg1[%c2_25, %c2_26] : memref<3x4xf32, #tpu.memory_space<smem>>
    %42 = vector.broadcast %41 : f32 to vector<8x128xf32>
    %43 = arith.mulf %42, %5 : vector<8x128xf32>
    %44 = arith.addf %40, %43 : vector<8x128xf32>
    %c2_27 = arith.constant 2 : index
    %c3_28 = arith.constant 3 : index
    %45 = memref.load %arg1[%c2_27, %c3_28] : memref<3x4xf32, #tpu.memory_space<smem>>
    %46 = vector.broadcast %45 : f32 to vector<8x128xf32>
    %47 = arith.addf %44, %46 : vector<8x128xf32>
    %48 = tpu.reciprocal %47 : vector<8x128xf32> -> vector<8x128xf32>
    %49 = arith.mulf %19, %48 : vector<8x128xf32>
    %c0_29 = arith.constant 0 : index
    %c0_30 = arith.constant 0 : index
    %c0_31 = arith.constant 0 : index
    %50 = vector.load %arg3[%c0_29, %c0_30, %c0_31] : memref<2x8x128xf32, #tpu.memory_space<vmem>>, vector<1x8x128xf32>
    %51 = vector.shape_cast %50 : vector<1x8x128xf32> to vector<8x128xf32>
    %52 = vector.shape_cast %49 : vector<8x128xf32> to vector<1x8x128xf32>
    tpu.vector_store %arg3[%c0_29, %c0_30, %c0_31], %52 {strides = array<i32>} : memref<2x8x128xf32, #tpu.memory_space<vmem>>, vector<1x8x128xf32>,
    %53 = arith.mulf %33, %48 : vector<8x128xf32>
    %c1_32 = arith.constant 1 : index
    %c0_33 = arith.constant 0 : index
    %c0_34 = arith.constant 0 : index
    %54 = vector.load %arg3[%c1_32, %c0_33, %c0_34] : memref<2x8x128xf32, #tpu.memory_space<vmem>>, vector<1x8x128xf32>
    %55 = vector.shape_cast %54 : vector<1x8x128xf32> to vector<8x128xf32>
    %56 = vector.shape_cast %53 : vector<8x128xf32> to vector<1x8x128xf32>
    tpu.vector_store %arg3[%c1_32, %c0_33, %c0_34], %56 {strides = array<i32>} : memref<2x8x128xf32, #tpu.memory_space<vmem>>, vector<1x8x128xf32>,
    return
  }
  func.func @transform_0(%arg0: i32) -> (i32, i32) {
    %c0_i32 = arith.constant 0 : i32
    %c0_i32_0 = arith.constant 0 : i32
    %c0_i32_1 = arith.constant 0 : i32
    return %c0_i32, %c0_i32_0 : i32, i32
  }
  func.func @transform_1(%arg0: i32) -> (i32, i32, i32) {
    %c0_i32 = arith.constant 0 : i32
    %c0_i32_0 = arith.constant 0 : i32
    %c0_i32_1 = arith.constant 0 : i32
    return %c0_i32, %arg0, %c0_i32_0 : i32, i32, i32
  }
  func.func @transform_2(%arg0: i32) -> (i32, i32, i32) {
    %c0_i32 = arith.constant 0 : i32
    %c0_i32_0 = arith.constant 0 : i32
    %c0_i32_1 = arith.constant 0 : i32
    return %c0_i32, %arg0, %c0_i32_0 : i32, i32, i32
  }
}

</mosaic_0001>

<llo_original>
// kernel: _camera_project.1
$region0: #{_camera_project.1}
  #allocation0 [shape = 'u32[]', space=smem, size = 0x4, offset = 0x4, fixed_abs, tag = 'smem constant byte address 0x4 - core index']
  #allocation1 [shape = 'u32[144,128]{1,0:T(1,128)}', space=vmem, size = 0x12000, scoped, tag = 'internal scratch']
  %s0 = inlined_call_operand.vmem [shape: f32[3,4], index: 0, kind: input, shape index: {}]
  %s1 = inlined_call_operand.vmem [shape: f32[3,8,128], index: 1, kind: input, shape index: {}]
  %s2 = inlined_call_operand.vmem [shape: f32[2,8,128], index: 2, kind: output, shape index: {}]
  %s3 = sld [smem:[#allocation0]]
  $region22: #{_camera_project.1} parent=0
    _
  %s5 = ssub.s32 1, %s3
  %s6 = scalar_select 0, %s5, %s3
  $region1: #{_camera_project.1} parent=0
    #allocation2 [shape = 'u8[2048]{0}', space=smem, size = 0x800, scoped, tag = 'input window, operand 0, single buffered']
    #allocation3 [shape = 's32[1]{0}', space=sflag, size = 0x4, scoped, tag = 'scoped memory for _camera_project.1']
    %7 = vsyncpa [#allocation3], 0
    // Predicated region
    $region2: #{_camera_project.1} parent=1 // pred_check
      _
    $region3: #{_camera_project.1} parent=1 // pred_check_branch
      %9 = sbr.rel (0) target = $region5
    $region4: #{_camera_project.1} parent=1 // pred_region
      %s11 = ssub.s32 64, 64
      %12 = vsyncadd [#allocation3], %s11
      %s14 = sshll.u32 %s0, 4
      %s15 = int_to_ptr.vmem [resolvable:$true] %s14
      %17 = dma.vmem_to_smem %s15, 64, [#allocation2], [#allocation3]
    $region5: #{_camera_project.1} parent=1 // pred_fallthru
      _
    // Predicated region
    $region6: #{_camera_project.1} parent=1 // pred_check
      _
    $region7: #{_camera_project.1} parent=1 // pred_check_branch
      %19 = sbr.rel (0) target = $region9
    $region8: #{_camera_project.1} parent=1 // pred_region
      _
    $region9: #{_camera_project.1} parent=1 // pred_fallthru
      _
    // Predicated region
    $region10: #{_camera_project.1} parent=1 // pred_check
      _
    $region11: #{_camera_project.1} parent=1 // pred_check_branch
      %21 = sbr.rel (0) target = $region13
    $region12: #{_camera_project.1} parent=1 // pred_region
      %22 = dma.done [#allocation3], 64
    $region13: #{_camera_project.1} parent=1 // pred_fallthru
      _
    %23 = sfence
    %v24 = vld [vmem:[%s1] sm:$0xff]
    %s25 = scalar_lea.vmem %s1, 8
    %v26 = vld [vmem:[%s25] sm:$0xff]
    %s27 = scalar_lea.vmem %s1, 16
    %v28 = vld [vmem:[%s27] sm:$0xff]
    %s29 = sld [smem:[#allocation2]]
    %v30 = vstv %s29
    %v31 = vmul.f32 %v30, %v24
    %s32 = sld [smem:[#allocation2 + $0x1]]
    %v33 = vstv %s32
    %v34 = vmul.f32 %v33, %v26
    %v35 = vadd.f32 %v31, %v34
    %s36 = sld [smem:[#allocation2 + $0x2]]
    %v37 = vstv %s36
    %v38 = vmul.f32 %v37, %v28
    %v39 = vadd.f32 %v35, %v38
    %s40 = sld [smem:[#allocation2 + $0x3]]
    %v41 = vstv %s40
    %v42 = vadd.f32 %v39, %v41
    %s43 = sld [smem:[#allocation2 + $0x80]]
    %v44 = vstv %s43
    %v45 = vmul.f32 %v44, %v24
    %s46 = sld [smem:[#allocation2 + $0x81]]
    %v47 = vstv %s46
    %v48 = vmul.f32 %v47, %v26
    %v49 = vadd.f32 %v45, %v48
    %s50 = sld [smem:[#allocation2 + $0x82]]
    %v51 = vstv %s50
    %v52 = vmul.f32 %v51, %v28
    %v53 = vadd.f32 %v49, %v52
    %s54 = sld [smem:[#allocation2 + $0x83]]
    %v55 = vstv %s54
    %v56 = vadd.f32 %v53, %v55
    %s57 = sld [smem:[#allocation2 + $0x100]]
    %v58 = vstv %s57
    %v59 = vmul.f32 %v58, %v24
    %s60 = sld [smem:[#allocation2 + $0x101]]
    %v61 = vstv %s60
    %v62 = vmul.f32 %v61, %v26
    %v63 = vadd.f32 %v59, %v62
    %s64 = sld [smem:[#allocation2 + $0x102]]
    %v65 = vstv %s64
    %v66 = vmul.f32 %v65, %v28
    %v67 = vadd.f32 %v63, %v66
    %s68 = sld [smem:[#allocation2 + $0x103]]
    %v69 = vstv %s68
    %v70 = vadd.f32 %v67, %v69
    %v71 = vrcp.pop %v70
    %v72 = vmul.f32 %v42, %v71
    %73 = vst [vmem:[%s2] sm:$0xff] %v72
    %v74 = vmul.f32 %v56, %v71
    %s75 = scalar_lea.vmem %s2, 8
    %76 = vst [vmem:[%s75] sm:$0xff] %v74
    // Predicated region
    $region14: #{_camera_project.1} parent=1 // pred_check
      _
    $region15: #{_camera_project.1} parent=1 // pred_check_branch
      %78 = sbr.rel (0) target = $region17
    $region16: #{_camera_project.1} parent=1 // pred_region
      _
    $region17: #{_camera_project.1} parent=1 // pred_fallthru
      _
    // Predicated region
    $region18: #{_camera_project.1} parent=1 // pred_check
      _
    $region19: #{_camera_project.1} parent=1 // pred_check_branch
      %80 = sbr.rel (0) target = $region21
    $region20: #{_camera_project.1} parent=1 // pred_region
      _
    $region21: #{_camera_project.1} parent=1 // pred_fallthru
      _
    %81 = vsyncpa [#allocation3], 1

</llo_original>
